<compile_context>
chip_gen: v7x
topology: tpu7x:2x2x1
jax: 0.10.0
libtpu: 0.0.40
codegen_flags: <defaults>
</compile_context>

<pallas_src>
import functools

import numpy as np

import jax
import jax.numpy as jnp
from jax.experimental import pallas as pl
from jax.experimental.pallas import tpu as pltpu


# ----------------------------------------------------------------------------
# Fused kernel: gather(word emb) -> 3x(Conv1d + ReLU + MaxPool) ->
#               gather(user cred) -> exp -> weighted sum -> tanh -> Linear
# ----------------------------------------------------------------------------
def _fused_forward_kernel(widx_ref, table_ref, cred_ref, uidx_ref, w_ref,
                          mb_ref, fcw_ref, fcb_ref, final_ref, scaled_ref, *,
                          n_posts, post_len, n_feat, k_max):
    n_rows = n_posts * post_len
    vocab_pad = table_ref.shape[0]
    user_pad = cred_ref.shape[1]

    # --- fused word-embedding gather: one-hot(idx) @ bf16 table on the MXU ---
    # TODO(synk): at production vocab sizes this must become a DMA row-gather.
    word_col = jax.lax.broadcasted_iota(jnp.int32, (n_rows, vocab_pad), 1)
    onehot_w = jnp.where(word_col == widx_ref[...], 1.0, 0.0).astype(jnp.bfloat16)
    emb = jnp.dot(onehot_w, table_ref[...],
                  preferred_element_type=jnp.float32)        # (N*L, E), bf16-valued

    # --- fused user-credibility gather + exp (scaled creds are an output) ----
    user_col = jax.lax.broadcasted_iota(jnp.int32, (n_posts, user_pad), 1)
    onehot_u = jnp.where(user_col == uidx_ref[...], 1.0, 0.0)
    creds = jnp.sum(onehot_u * cred_ref[...], axis=1, keepdims=True)   # (N, 1)
    scaled = jnp.exp(creds)
    scaled_ref[...] = scaled

    # --- im2col via sublane rolls; each tap cast to bf16 before concat -------
    taps = [emb.astype(jnp.bfloat16)]
    for j in range(1, k_max):
        taps.append(pltpu.roll(emb, shift=n_rows - j, axis=0)   # == roll(-j)
                    .astype(jnp.bfloat16))
    lhs = jnp.concatenate(taps, axis=1)                      # (N*L, k_max*E) bf16

    # --- all three convs in ONE bf16 MXU pass (contraction = k_max*E) --------
    acc = jnp.dot(lhs, w_ref[...], preferred_element_type=jnp.float32)  # (N*L, 3C)

    # --- hoisted (bias + validity mask) constant, vectorized pool + ReLU -----
    acc3 = acc.reshape(n_posts, post_len, n_feat) + mb_ref[...][None, :, :]
    pooled = jnp.maximum(jnp.max(acc3, axis=1), 0.0)         # (N, 3C)

    # --- credibility-weighted sum over posts (single sublane reduce) ---------
    thread = jnp.sum(scaled * pooled, axis=0, keepdims=True)  # (1, 3C)

    # --- tanh + final linear; bf16 weights, lane-dense (1, out_pad) store ----
    thread = jnp.tanh(thread).astype(jnp.bfloat16)
    final_ref[...] = (jnp.dot(thread, fcw_ref[...],
                              preferred_element_type=jnp.float32)
                      + fcb_ref[...])


def neat_cnn_wpe_forward(params, x_post_word_idxs, x_user_idxs, x_user_clusters):
    del x_user_clusters  # unused in the PyTorch forward as well

    n_posts, post_len = x_post_word_idxs.shape
    vocab_size, embed_size = params["word_embeddings"].shape
    user_size = params["user_credibility"].shape[0]

    conv_ws = [params[f"conv{i}_w"] for i in (1, 2, 3)]          # (k_i, E, C)
    conv_bs = [params[f"conv{i}_b"] for i in (1, 2, 3)]          # (C,)
    kernel_sizes = tuple(int(w.shape[0]) for w in conv_ws)
    num_channels = int(conv_ws[0].shape[-1])
    k_max = max(kernel_sizes)
    n_feat = num_channels * len(kernel_sizes)
    n_rows = n_posts * post_len

    # Pack all taps of all convs into one (k_max*E, 3C) bf16 weight.  Row
    # j*E + e of column block i holds conv_i[j, e, :]; rows for taps a shorter
    # conv lacks are zero, so one matmul covers all kernel widths.
    cols = []
    for w in conv_ws:
        k_i = int(w.shape[0])
        wi = w.reshape(k_i * embed_size, num_channels)
        wi = jnp.pad(wi, ((0, (k_max - k_i) * embed_size), (0, 0)))
        cols.append(wi)
    w_packed = jnp.concatenate(cols, axis=1).astype(jnp.bfloat16)  # (kmax*E, 3C)

    # Hoisted constant: conv bias folded into the per-row validity mask.
    # Rows >= L - k_i + 1 of conv group i wrap across post boundaries in the
    # roll-based im2col and are excluded from the max by the additive -1e30.
    mask_np = np.zeros((post_len, n_feat), np.float32)
    for gi, k_i in enumerate(kernel_sizes):
        mask_np[post_len - k_i + 1:,
                gi * num_channels:(gi + 1) * num_channels] = -1e30
    b_packed = jnp.concatenate(conv_bs).reshape(1, n_feat)
    mask_plus_bias = jnp.asarray(mask_np) + b_packed               # (L, 3C)

    # Padded bf16 embedding table and lane-padded user-credibility row.
    vocab_pad = ((vocab_size + 127) // 128) * 128
    table_bf = jnp.pad(params["word_embeddings"],
                       ((0, vocab_pad - vocab_size), (0, 0))).astype(jnp.bfloat16)
    user_pad = ((user_size + 127) // 128) * 128
    cred_row = jnp.pad(params["user_credibility"].reshape(1, user_size),
                       ((0, 0), (0, user_pad - user_size)))

    # Final linear layer: lane-dense (multiple of 128) output, bf16 weights.
    num_classes = int(params["fc_w"].shape[1])
    out_pad = ((num_classes + 127) // 128) * 128
    fc_w_bf = jnp.pad(params["fc_w"],
                      ((0, 0), (0, out_pad - num_classes))).astype(jnp.bfloat16)
    fc_b_pad = jnp.pad(params["fc_b"], (0, out_pad - num_classes)).reshape(1, out_pad)

    widx = x_post_word_idxs.reshape(n_rows, 1).astype(jnp.int32)
    uidx = x_user_idxs.reshape(n_posts, 1).astype(jnp.int32)

    kernel = functools.partial(
        _fused_forward_kernel,
        n_posts=n_posts, post_len=post_len, n_feat=n_feat, k_max=k_max)

    vmem = pltpu.MemorySpace.VMEM
    final_pad, scaled = pl.pallas_call(
        kernel,
        out_shape=(jax.ShapeDtypeStruct((1, out_pad), jnp.float32),
                   jax.ShapeDtypeStruct((n_posts, 1), jnp.float32)),
        in_specs=[pl.BlockSpec(memory_space=vmem) for _ in range(8)],
        out_specs=(pl.BlockSpec(memory_space=vmem),
                   pl.BlockSpec(memory_space=vmem)),
    )(widx, table_bf, cred_row, uidx, w_packed, mask_plus_bias, fc_w_bf, fc_b_pad)

    final_out = final_pad[:, :num_classes]
    return final_out, scaled


# ----------------------------------------------------------------------------
# Pure-JAX reference (same math; embeddings / conv / fc weights and the thread
# feature rounded through bf16 to mirror the kernel's MXU dtype)
# ----------------------------------------------------------------------------
def reference_forward(params, x_post_word_idxs, x_user_idxs):
    hi = jax.lax.Precision.HIGHEST
    emb_table = params["word_embeddings"].astype(jnp.bfloat16).astype(jnp.float32)
    emb = emb_table[x_post_word_idxs]                              # (N, L, E)
    N, L, E = emb.shape
    feats = []
    for i in (1, 2, 3):
        w = params[f"conv{i}_w"].astype(jnp.bfloat16).astype(jnp.float32)
        b = params[f"conv{i}_b"]
        k, _, C = w.shape
        l_out = L - k + 1
        acc = jnp.zeros((N, l_out, C), jnp.float32)
        for j in range(k):
            acc += jnp.einsum("nle,ec->nlc", emb[:, j:j + l_out, :], w[j],
                              precision=hi)
        acc = jnp.maximum(acc + b, 0.0)
        feats.append(jnp.max(acc, axis=1))
    post_feature = jnp.concatenate(feats, axis=1)                  # (N, 3C)
    scaled = jnp.exp(params["user_credibility"][x_user_idxs])      # (N, 1)
    thread = jnp.tanh(jnp.matmul(scaled.T, post_feature, precision=hi))
    thread = thread.astype(jnp.bfloat16).astype(jnp.float32)
    fc_w = params["fc_w"].astype(jnp.bfloat16).astype(jnp.float32)
    out = jnp.matmul(thread, fc_w, precision=hi) + params["fc_b"][None, :]
    return out, scaled


# ----------------------------------------------------------------------------
# Deterministic parameter init + driver
# ----------------------------------------------------------------------------
def make_params(key, vocab_size, user_size, num_classes, embed_size,
                num_channels, kernel_sizes):
    keys = jax.random.split(key, 12)
    params = {
        "word_embeddings": 0.1 * jax.random.normal(
            keys[0], (vocab_size, embed_size), jnp.float32),
        "user_credibility": 0.1 * jax.random.normal(
            keys[1], (user_size, 1), jnp.float32),
        "fc_w": 0.1 * jax.random.normal(
            keys[2], (num_channels * len(kernel_sizes), num_classes),
            jnp.float32),
        "fc_b": jnp.full((num_classes,), 0.01, jnp.float32),
    }
    for i, k in enumerate(kernel_sizes, start=1):
        # PyTorch Conv1d weight is (C, E, k); stored here as (k, E, C).
        params[f"conv{i}_w"] = 0.1 * jax.random.normal(
            keys[2 + 2 * i], (k, embed_size, num_channels), jnp.float32)
        params[f"conv{i}_b"] = 0.1 * jax.random.normal(
            keys[3 + 2 * i], (num_channels,), jnp.float32)
    return params


if __name__ == "__main__":
    vocab_size, user_size, num_classes = 100, 10, 4
    max_post_len, embed_size, num_channels = 16, 32, 16
    kernel_sizes = (2, 3, 4)
    n_posts = 8

    key = jax.random.PRNGKey(0)
    k_params, k_words, k_users, k_clusters = jax.random.split(key, 4)
    params = make_params(k_params, vocab_size, user_size, num_classes,
                         embed_size, num_channels, kernel_sizes)

    x_post_word_idxs = jax.random.randint(
        k_words, (n_posts, max_post_len), 0, vocab_size, jnp.int32)
    x_user_idxs = jax.random.randint(k_users, (n_posts,), 0, user_size, jnp.int32)
    x_user_clusters = jax.random.randint(k_clusters, (n_posts,), 0, 3, jnp.int32)

    fwd = jax.jit(neat_cnn_wpe_forward)
    final_out, scaled_creds = fwd(
        params, x_post_word_idxs, x_user_idxs, x_user_clusters)
    jax.block_until_ready((final_out, scaled_creds))

    ref_out, ref_creds = reference_forward(params, x_post_word_idxs, x_user_idxs)
    assert final_out.shape == (1, num_classes)
    assert scaled_creds.shape == (n_posts, 1)
    assert jnp.allclose(final_out, ref_out, rtol=2e-3, atol=2e-3)
    assert jnp.allclose(scaled_creds, ref_creds, rtol=2e-3, atol=2e-3)

    print("KERNEL_OK")
</pallas_src>

<mosaic_0001>
module attributes {stable_mosaic.version = 11 : i64} {
  func.func @_fused_forward_kernel(%arg0: memref<128x1xi32, #tpu.memory_space<vmem>>, %arg1: memref<128x32xbf16, #tpu.memory_space<vmem>>, %arg2: memref<1x128xf32, #tpu.memory_space<vmem>>, %arg3: memref<8x1xi32, #tpu.memory_space<vmem>>, %arg4: memref<128x48xbf16, #tpu.memory_space<vmem>>, %arg5: memref<16x48xf32, #tpu.memory_space<vmem>>, %arg6: memref<48x128xbf16, #tpu.memory_space<vmem>>, %arg7: memref<1x128xf32, #tpu.memory_space<vmem>>, %arg8: memref<1x128xf32, #tpu.memory_space<vmem>>, %arg9: memref<8x1xf32, #tpu.memory_space<vmem>>) attributes {dimension_semantics = [], scalar_prefetch = 0 : i64, scratch_operands = 0 : i64, tpu.core_type = #tpu.core_type<tc>} {
    %0 = tpu.iota {dimensions = array<i32: 1>} : vector<128x128xi32>
    %c0 = arith.constant 0 : index
    %c0_0 = arith.constant 0 : index
    %1 = vector.load %arg0[%c0, %c0_0] : memref<128x1xi32, #tpu.memory_space<vmem>>, vector<128x1xi32>
    %2 = vector.broadcast %1 : vector<128x1xi32> to vector<128x128xi32>
    %3 = arith.cmpi eq, %0, %2 : vector<128x128xi32>
    %cst = arith.constant 1.000000e+00 : f32
    %cst_1 = arith.constant 0.000000e+00 : f32
    %4 = vector.broadcast %cst : f32 to vector<128x128xf32>
    %5 = vector.broadcast %cst_1 : f32 to vector<128x128xf32>
    %6 = arith.select %3, %4, %5 : vector<128x128xi1>, vector<128x128xf32>
    %7 = arith.truncf %6 : vector<128x128xf32> to vector<128x128xbf16>
    %c0_2 = arith.constant 0 : index
    %c0_3 = arith.constant 0 : index
    %8 = vector.load %arg1[%c0_2, %c0_3] : memref<128x32xbf16, #tpu.memory_space<vmem>>, vector<128x32xbf16>
    %cst_4 = arith.constant dense<0.000000e+00> : vector<128x32xf32>
    %9 = tpu.matmul %7, %8, %cst_4 {dimension_numbers = #tpu.dot_dimension_numbers<[1], [0], [0], [1], [0, 0, 1, 1], [], []>} : vector<128x128xbf16>, vector<128x32xbf16>, vector<128x32xf32> -> vector<128x32xf32>
    %10 = tpu.iota {dimensions = array<i32: 1>} : vector<8x128xi32>
    %c0_5 = arith.constant 0 : index
    %c0_6 = arith.constant 0 : index
    %11 = vector.load %arg3[%c0_5, %c0_6] : memref<8x1xi32, #tpu.memory_space<vmem>>, vector<8x1xi32>
    %12 = vector.broadcast %11 : vector<8x1xi32> to vector<8x128xi32>
    %13 = arith.cmpi eq, %10, %12 : vector<8x128xi32>
    %cst_7 = arith.constant 1.000000e+00 : f32
    %cst_8 = arith.constant 0.000000e+00 : f32
    %14 = vector.broadcast %cst_7 : f32 to vector<8x128xf32>
    %15 = vector.broadcast %cst_8 : f32 to vector<8x128xf32>
    %16 = arith.select %13, %14, %15 : vector<8x128xi1>, vector<8x128xf32>
    %c0_9 = arith.constant 0 : index
    %c0_10 = arith.constant 0 : index
    %17 = vector.load %arg2[%c0_9, %c0_10] : memref<1x128xf32, #tpu.memory_space<vmem>>, vector<1x128xf32>
    %18 = vector.broadcast %17 : vector<1x128xf32> to vector<8x128xf32>
    %19 = arith.mulf %16, %18 : vector<8x128xf32>
    %cst_11 = arith.constant dense<0.000000e+00> : vector<8xf32>
    %20 = vector.multi_reduction <add>, %19, %cst_11 [1] : vector<8x128xf32> to vector<8xf32>
    %21 = vector.shape_cast %20 : vector<8xf32> to vector<8x1xf32>
    %22 = math.exp %21 : vector<8x1xf32>
    %c0_12 = arith.constant 0 : index
    %c0_13 = arith.constant 0 : index
    %23 = vector.load %arg9[%c0_12, %c0_13] : memref<8x1xf32, #tpu.memory_space<vmem>>, vector<8x1xf32>
    tpu.vector_store %arg9[%c0_12, %c0_13], %22 {strides = array<i32>} : memref<8x1xf32, #tpu.memory_space<vmem>>, vector<8x1xf32>,
    %24 = arith.truncf %9 : vector<128x32xf32> to vector<128x32xbf16>
    %c127_i32 = arith.constant 127 : i32
    %25 = tpu.dynamic_rotate %9 by %c127_i32 dim 0 : vector<128x32xf32>, i32 -> vector<128x32xf32>
    %26 = arith.truncf %25 : vector<128x32xf32> to vector<128x32xbf16>
    %c126_i32 = arith.constant 126 : i32
    %27 = tpu.dynamic_rotate %9 by %c126_i32 dim 0 : vector<128x32xf32>, i32 -> vector<128x32xf32>
    %28 = arith.truncf %27 : vector<128x32xf32> to vector<128x32xbf16>
    %c125_i32 = arith.constant 125 : i32
    %29 = tpu.dynamic_rotate %9 by %c125_i32 dim 0 : vector<128x32xf32>, i32 -> vector<128x32xf32>
    %30 = arith.truncf %29 : vector<128x32xf32> to vector<128x32xbf16>
    %31 = tpu.concatenate %24, %26, %28, %30 in 1 : vector<128x32xbf16>, vector<128x32xbf16>, vector<128x32xbf16>, vector<128x32xbf16> -> vector<128x128xbf16>
    %c0_14 = arith.constant 0 : index
    %c0_15 = arith.constant 0 : index
    %32 = vector.load %arg4[%c0_14, %c0_15] : memref<128x48xbf16, #tpu.memory_space<vmem>>, vector<128x48xbf16>
    %cst_16 = arith.constant dense<0.000000e+00> : vector<128x48xf32>
    %33 = tpu.matmul %31, %32, %cst_16 {dimension_numbers = #tpu.dot_dimension_numbers<[1], [0], [0], [1], [0, 0, 1, 1], [], []>} : vector<128x128xbf16>, vector<128x48xbf16>, vector<128x48xf32> -> vector<128x48xf32>
    %34 = vector.shape_cast %33 : vector<128x48xf32> to vector<8x16x48xf32>
    %c0_17 = arith.constant 0 : index
    %c0_18 = arith.constant 0 : index
    %35 = vector.load %arg5[%c0_17, %c0_18] : memref<16x48xf32, #tpu.memory_space<vmem>>, vector<16x48xf32>
    %36 = vector.shape_cast %35 : vector<16x48xf32> to vector<1x16x48xf32>
    %37 = vector.broadcast %36 : vector<1x16x48xf32> to vector<8x16x48xf32>
    %38 = arith.addf %34, %37 : vector<8x16x48xf32>
    %cst_19 = arith.constant dense<0xFF800000> : vector<8x48xf32>
    %39 = vector.multi_reduction <maximumf>, %38, %cst_19 [1] : vector<8x16x48xf32> to vector<8x48xf32>
    %cst_20 = arith.constant 0.000000e+00 : f32
    %40 = vector.broadcast %cst_20 : f32 to vector<8x48xf32>
    %41 = arith.maximumf %39, %40 : vector<8x48xf32>
    %42 = vector.broadcast %22 : vector<8x1xf32> to vector<8x48xf32>
    %43 = arith.mulf %42, %41 : vector<8x48xf32>
    %cst_21 = arith.constant dense<0.000000e+00> : vector<48xf32>
    %44 = vector.multi_reduction <add>, %43, %cst_21 [0] : vector<8x48xf32> to vector<48xf32>
    %45 = vector.shape_cast %44 : vector<48xf32> to vector<1x48xf32>
    %46 = math.tanh %45 : vector<1x48xf32>
    %47 = arith.truncf %46 : vector<1x48xf32> to vector<1x48xbf16>
    %c0_22 = arith.constant 0 : index
    %c0_23 = arith.constant 0 : index
    %48 = vector.load %arg6[%c0_22, %c0_23] : memref<48x128xbf16, #tpu.memory_space<vmem>>, vector<48x128xbf16>
    %cst_24 = arith.constant dense<0.000000e+00> : vector<1x128xf32>
    %49 = tpu.matmul %47, %48, %cst_24 {dimension_numbers = #tpu.dot_dimension_numbers<[1], [0], [0], [1], [0, 0, 1, 1], [], []>} : vector<1x48xbf16>, vector<48x128xbf16>, vector<1x128xf32> -> vector<1x128xf32>
    %c0_25 = arith.constant 0 : index
    %c0_26 = arith.constant 0 : index
    %50 = vector.load %arg7[%c0_25, %c0_26] : memref<1x128xf32, #tpu.memory_space<vmem>>, vector<1x128xf32>
    %51 = arith.addf %49, %50 : vector<1x128xf32>
    %c0_27 = arith.constant 0 : index
    %c0_28 = arith.constant 0 : index
    %52 = vector.load %arg8[%c0_27, %c0_28] : memref<1x128xf32, #tpu.memory_space<vmem>>, vector<1x128xf32>
    tpu.vector_store %arg8[%c0_27, %c0_28], %51 {strides = array<i32>} : memref<1x128xf32, #tpu.memory_space<vmem>>, vector<1x128xf32>,
    return
  }
}

</mosaic_0001>

<llo_original>
// kernel: neat_cnn_wpe_forward.1
$region0: #{neat_cnn_wpe_forward.1}
  #allocation0 [shape = 'u32[]', space=smem, size = 0x4, offset = 0x4, fixed_abs, tag = 'smem constant byte address 0x4 - core index']
  #allocation1 [shape = 'u32[144,128]{1,0:T(1,128)}', space=vmem, size = 0x12000, scoped, tag = 'internal scratch']
  %s0 = inlined_call_operand.vmem [shape: s32[128,1], index: 0, kind: input, shape index: {}]
  %s1 = inlined_call_operand.vmem [shape: bf16[128,32], index: 1, kind: input, shape index: {}]
  %s2 = inlined_call_operand.vmem [shape: f32[1,128], index: 2, kind: input, shape index: {}]
  %s3 = inlined_call_operand.vmem [shape: s32[8,1], index: 3, kind: input, shape index: {}]
  %s4 = inlined_call_operand.vmem [shape: bf16[128,48], index: 4, kind: input, shape index: {}]
  %s5 = inlined_call_operand.vmem [shape: f32[16,48], index: 5, kind: input, shape index: {}]
  %s6 = inlined_call_operand.vmem [shape: bf16[48,128], index: 6, kind: input, shape index: {}]
  %s7 = inlined_call_operand.vmem [shape: f32[1,128], index: 7, kind: input, shape index: {}]
  %s8 = inlined_call_operand.hbm [shape: f32[1,128], index: 8, kind: output, shape index: {0}]
  %s9 = inlined_call_operand.vmem [shape: f32[8,1], index: 9, kind: output, shape index: {1}]
  %10 = xla_tuple %s8, %s9
  %s11 = sld [smem:[#allocation0]]
  $region50: #{neat_cnn_wpe_forward.1} parent=0
    _
  %s13 = ssub.s32 1, %s11
  %s14 = scalar_select 0, %s13, %s11
  $region1: #{neat_cnn_wpe_forward.1} parent=0
    #allocation2 [shape = 'u8[512]{0}', space=vmem, size = 0x400, scoped, tag = 'output window, operand 0, single buffered']
    #allocation3 [shape = 's32[1]{0}', space=sflag, size = 0x4, scoped, tag = 'scoped memory for neat_cnn_wpe_forward.1']
    %15 = vsyncpa [#allocation3], 0
    // Predicated region
    $region2: #{neat_cnn_wpe_forward.1} parent=1 // pred_check
      _
    $region3: #{neat_cnn_wpe_forward.1} parent=1 // pred_check_branch
      %17 = sbr.rel (0) target = $region5
    $region4: #{neat_cnn_wpe_forward.1} parent=1 // pred_region
      _
    $region5: #{neat_cnn_wpe_forward.1} parent=1 // pred_fallthru
      _
    // Predicated region
    $region6: #{neat_cnn_wpe_forward.1} parent=1 // pred_check
      _
    $region7: #{neat_cnn_wpe_forward.1} parent=1 // pred_check_branch
      %19 = sbr.rel (0) target = $region9
    $region8: #{neat_cnn_wpe_forward.1} parent=1 // pred_region
      _
    $region9: #{neat_cnn_wpe_forward.1} parent=1 // pred_fallthru
      _
    // Predicated region
    $region10: #{neat_cnn_wpe_forward.1} parent=1 // pred_check
      _
    $region11: #{neat_cnn_wpe_forward.1} parent=1 // pred_check_branch
      %21 = sbr.rel (0) target = $region13
    $region12: #{neat_cnn_wpe_forward.1} parent=1 // pred_region
      _
    $region13: #{neat_cnn_wpe_forward.1} parent=1 // pred_fallthru
      _
    // Predicated region
    $region14: #{neat_cnn_wpe_forward.1} parent=1 // pred_check
      _
    $region15: #{neat_cnn_wpe_forward.1} parent=1 // pred_check_branch
      %23 = sbr.rel (0) target = $region17
    $region16: #{neat_cnn_wpe_forward.1} parent=1 // pred_region
      _
    $region17: #{neat_cnn_wpe_forward.1} parent=1 // pred_fallthru
      _
    // Predicated region
    $region18: #{neat_cnn_wpe_forward.1} parent=1 // pred_check
      _
    $region19: #{neat_cnn_wpe_forward.1} parent=1 // pred_check_branch
      %25 = sbr.rel (0) target = $region21
    $region20: #{neat_cnn_wpe_forward.1} parent=1 // pred_region
      _
    $region21: #{neat_cnn_wpe_forward.1} parent=1 // pred_fallthru
      _
    // Predicated region
    $region22: #{neat_cnn_wpe_forward.1} parent=1 // pred_check
      _
    $region23: #{neat_cnn_wpe_forward.1} parent=1 // pred_check_branch
      %27 = sbr.rel (0) target = $region25
    $region24: #{neat_cnn_wpe_forward.1} parent=1 // pred_region
      _
    $region25: #{neat_cnn_wpe_forward.1} parent=1 // pred_fallthru
      _
    // Predicated region
    $region26: #{neat_cnn_wpe_forward.1} parent=1 // pred_check
      _
    $region27: #{neat_cnn_wpe_forward.1} parent=1 // pred_check_branch
      %29 = sbr.rel (0) target = $region29
    $region28: #{neat_cnn_wpe_forward.1} parent=1 // pred_region
      _
    $region29: #{neat_cnn_wpe_forward.1} parent=1 // pred_fallthru
      _
    // Predicated region
    $region30: #{neat_cnn_wpe_forward.1} parent=1 // pred_check
      _
    $region31: #{neat_cnn_wpe_forward.1} parent=1 // pred_check_branch
      %31 = sbr.rel (0) target = $region33
    $region32: #{neat_cnn_wpe_forward.1} parent=1 // pred_region
      _
    $region33: #{neat_cnn_wpe_forward.1} parent=1 // pred_fallthru
      _
    %v33 = vlaneseq
    %v34 = vand.u32 %v33, 127
    %v35 = vld [vmem:[%s0] sm:$0xff]
    %v36 = vld [vmem:[%s0 + $0x8] sm:$0xff]
    %v37 = vld [vmem:[%s0 + $0x10] sm:$0xff]
    %v38 = vld [vmem:[%s0 + $0x18] sm:$0xff]
    %v39 = vld [vmem:[%s0 + $0x20] sm:$0xff]
    %v40 = vld [vmem:[%s0 + $0x28] sm:$0xff]
    %v41 = vld [vmem:[%s0 + $0x30] sm:$0xff]
    %v42 = vld [vmem:[%s0 + $0x38] sm:$0xff]
    %v43 = vld [vmem:[%s0 + $0x40] sm:$0xff]
    %v44 = vld [vmem:[%s0 + $0x48] sm:$0xff]
    %v45 = vld [vmem:[%s0 + $0x50] sm:$0xff]
    %v46 = vld [vmem:[%s0 + $0x58] sm:$0xff]
    %v47 = vld [vmem:[%s0 + $0x60] sm:$0xff]
    %v48 = vld [vmem:[%s0 + $0x68] sm:$0xff]
    %v49 = vld [vmem:[%s0 + $0x70] sm:$0xff]
    %v50 = vld [vmem:[%s0 + $0x78] sm:$0xff]
    %51 = vset.pattern.permute.xlu0 0
    %52 = vperm.xlu0 %51, %v35
    %v53 = vpop.permute.xlu0 %52
    %54 = vset.pattern.permute.xlu0 0
    %55 = vperm.xlu0 %54, %v36
    %v56 = vpop.permute.xlu0 %55
    %57 = vset.pattern.permute.xlu0 0
    %58 = vperm.xlu0 %57, %v37
    %v59 = vpop.permute.xlu0 %58
    %60 = vset.pattern.permute.xlu0 0
    %61 = vperm.xlu0 %60, %v38
    %v62 = vpop.permute.xlu0 %61
    %63 = vset.pattern.permute.xlu0 0
    %64 = vperm.xlu0 %63, %v39
    %v65 = vpop.permute.xlu0 %64
    %66 = vset.pattern.permute.xlu0 0
    %67 = vperm.xlu0 %66, %v40
    %v68 = vpop.permute.xlu0 %67
    %69 = vset.pattern.permute.xlu0 0
    %70 = vperm.xlu0 %69, %v41
    %v71 = vpop.permute.xlu0 %70
    %72 = vset.pattern.permute.xlu0 0
    %73 = vperm.xlu0 %72, %v42
    %v74 = vpop.permute.xlu0 %73
    %75 = vset.pattern.permute.xlu0 0
    %76 = vperm.xlu0 %75, %v43
    %v77 = vpop.permute.xlu0 %76
    %78 = vset.pattern.permute.xlu0 0
    %79 = vperm.xlu0 %78, %v44
    %v80 = vpop.permute.xlu0 %79
    %81 = vset.pattern.permute.xlu0 0
    %82 = vperm.xlu0 %81, %v45
    %v83 = vpop.permute.xlu0 %82
    %84 = vset.pattern.permute.xlu0 0
    %85 = vperm.xlu0 %84, %v46
    %v86 = vpop.permute.xlu0 %85
    %87 = vset.pattern.permute.xlu0 0
    %88 = vperm.xlu0 %87, %v47
    %v89 = vpop.permute.xlu0 %88
    %90 = vset.pattern.permute.xlu0 0
    %91 = vperm.xlu0 %90, %v48
    %v92 = vpop.permute.xlu0 %91
    %93 = vset.pattern.permute.xlu0 0
    %94 = vperm.xlu0 %93, %v49
    %v95 = vpop.permute.xlu0 %94
    %96 = vset.pattern.permute.xlu0 0
    %97 = vperm.xlu0 %96, %v50
    %v98 = vpop.permute.xlu0 %97
    %vm99 = vcmp.eq.s32.totalorder %v34, %v53
    %vm100 = vcmp.eq.s32.totalorder %v34, %v56
    %vm101 = vcmp.eq.s32.totalorder %v34, %v59
    %vm102 = vcmp.eq.s32.totalorder %v34, %v62
    %vm103 = vcmp.eq.s32.totalorder %v34, %v65
    %vm104 = vcmp.eq.s32.totalorder %v34, %v68
    %vm105 = vcmp.eq.s32.totalorder %v34, %v71
    %vm106 = vcmp.eq.s32.totalorder %v34, %v74
    %vm107 = vcmp.eq.s32.totalorder %v34, %v77
    %vm108 = vcmp.eq.s32.totalorder %v34, %v80
    %vm109 = vcmp.eq.s32.totalorder %v34, %v83
    %vm110 = vcmp.eq.s32.totalorder %v34, %v86
    %vm111 = vcmp.eq.s32.totalorder %v34, %v89
    %vm112 = vcmp.eq.s32.totalorder %v34, %v92
    %vm113 = vcmp.eq.s32.totalorder %v34, %v95
    %vm114 = vcmp.eq.s32.totalorder %v34, %v98
    %v115 = vsel %vm99, 1.0, 0.0
    %v116 = vsel %vm100, 1.0, 0.0
    %v117 = vsel %vm101, 1.0, 0.0
    %v118 = vsel %vm102, 1.0, 0.0
    %v119 = vsel %vm103, 1.0, 0.0
    %v120 = vsel %vm104, 1.0, 0.0
    %v121 = vsel %vm105, 1.0, 0.0
    %v122 = vsel %vm106, 1.0, 0.0
    %v123 = vsel %vm107, 1.0, 0.0
    %v124 = vsel %vm108, 1.0, 0.0
    %v125 = vsel %vm109, 1.0, 0.0
    %v126 = vsel %vm110, 1.0, 0.0
    %v127 = vsel %vm111, 1.0, 0.0
    %v128 = vsel %vm112, 1.0, 0.0
    %v129 = vsel %vm113, 1.0, 0.0
    %v130 = vsel %vm114, 1.0, 0.0
    %v131 = vpack.c.bf16 %v116, %v115
    %v132 = vpack.c.bf16 %v118, %v117
    %v133 = vpack.c.bf16 %v120, %v119
    %v134 = vpack.c.bf16 %v122, %v121
    %v135 = vpack.c.bf16 %v124, %v123
    %v136 = vpack.c.bf16 %v126, %v125
    %v137 = vpack.c.bf16 %v128, %v127
    %v138 = vpack.c.bf16 %v130, %v129
    %v139 = vld [vmem:[%s1] sm:$0xf]
    %v140 = vld [vmem:[%s1 + $0x4] sm:$0xf]
    %v141 = vld [vmem:[%s1 + $0x8] sm:$0xf]
    %v142 = vld [vmem:[%s1 + $0xc] sm:$0xf]
    %v143 = vld [vmem:[%s1 + $0x10] sm:$0xf]
    %v144 = vld [vmem:[%s1 + $0x14] sm:$0xf]
    %v145 = vld [vmem:[%s1 + $0x18] sm:$0xf]
    %v146 = vld [vmem:[%s1 + $0x1c] sm:$0xf]
    %v147 = vld [vmem:[%s1 + $0x20] sm:$0xf]
    %v148 = vld [vmem:[%s1 + $0x24] sm:$0xf]
    %v149 = vld [vmem:[%s1 + $0x28] sm:$0xf]
    %v150 = vld [vmem:[%s1 + $0x2c] sm:$0xf]
    %v151 = vld [vmem:[%s1 + $0x30] sm:$0xf]
    %v152 = vld [vmem:[%s1 + $0x34] sm:$0xf]
    %v153 = vld [vmem:[%s1 + $0x38] sm:$0xf]
    %v154 = vld [vmem:[%s1 + $0x3c] sm:$0xf]
    %v171 = vunpack.c.l.b16 %v139
    %v172 = vunpack.c.l.b16 %v140
    %v173 = vunpack.c.l.b16 %v141
    %v174 = vunpack.c.l.b16 %v142
    %v175 = vunpack.c.l.b16 %v143
    %v176 = vunpack.c.l.b16 %v144
    %v177 = vunpack.c.l.b16 %v145
    %v178 = vunpack.c.l.b16 %v146
    %v179 = vunpack.c.l.b16 %v147
    %v180 = vunpack.c.l.b16 %v148
    %v181 = vunpack.c.l.b16 %v149
    %v182 = vunpack.c.l.b16 %v150
    %v183 = vunpack.c.l.b16 %v151
    %v184 = vunpack.c.l.b16 %v152
    %v185 = vunpack.c.l.b16 %v153
    %v186 = vunpack.c.l.b16 %v154
    %v187 = vpack.c.b16 %v172, %v171
    %v188 = vpack.c.b16 %v174, %v173
    %v189 = vpack.c.b16 %v176, %v175
    %v190 = vpack.c.b16 %v178, %v177
    %v191 = vpack.c.b16 %v180, %v179
    %v192 = vpack.c.b16 %v182, %v181
    %v193 = vpack.c.b16 %v184, %v183
    %v194 = vpack.c.b16 %v186, %v185
    %203 = vmatprep.subr.bf16.mxu0 0
    %204 = vmatpush1.bf16.msra.mxu0 %v187
    %205 = vmatprep.subr.bf16.mxu0 0
    %206 = vmatpush1.bf16.msra.mxu0 %v188
    %207 = vmatprep.subr.bf16.mxu0 0
    %208 = vmatpush1.bf16.msra.mxu0 %v189
    %209 = vmatprep.subr.bf16.mxu0 0
    %210 = vmatpush1.bf16.msra.mxu0 %v190
    %211 = vmatprep.subr.bf16.mxu0 0
    %212 = vmatpush1.bf16.msra.mxu0 %v191
    %213 = vmatprep.subr.bf16.mxu0 0
    %214 = vmatpush1.bf16.msra.mxu0 %v192
    %215 = vmatprep.subr.bf16.mxu0 0
    %216 = vmatpush1.bf16.msra.mxu0 %v193
    %217 = vmatprep.subr.bf16.mxu0 0
    %218 = vmatpush1.bf16.msra.mxu0 %v194
    %219 = vmatprep.subr.bf16.mxu0 0
    %220 = vmatpush1.bf16.msra.mxu0 0
    %221 = vmatprep.subr.bf16.mxu0 0
    %222 = vmatpush1.bf16.msra.mxu0 0
    %223 = vmatprep.subr.bf16.mxu0 0
    %224 = vmatpush1.bf16.msra.mxu0 0
    %225 = vmatprep.subr.bf16.mxu0 0
    %226 = vmatpush1.bf16.msra.mxu0 0
    %227 = vmatprep.subr.bf16.mxu0 0
    %228 = vmatpush1.bf16.msra.mxu0 0
    %229 = vmatprep.subr.bf16.mxu0 0
    %230 = vmatpush1.bf16.msra.mxu0 0
    %231 = vmatprep.subr.bf16.mxu0 0
    %232 = vmatpush1.bf16.msra.mxu0 0
    %233 = vmatprep.subr.bf16.mxu0 0
    %234 = vmatpush1.bf16.msra.mxu0 0
    %235 = vmatprep.mubr.bf16.mxu0 0
    %236 = vmatmul.mubr.bf16.gmra.mrb[0].mxu0 %v131
    %v237 = vpop.f32.mrb[0].mxu0
    %v238 = vadd.f32 0.0, %v237
    %v239 = vpop.f32.mrb[0].mxu0
    %v240 = vpop.f32.mrb[0].mxu0
    %v241 = vadd.f32 0.0, %v240
    %v242 = vpop.f32.mrb[0].mxu0
    %243 = vmatprep.mubr.bf16.mxu0 0
    %244 = vmatmul.mubr.bf16.gmra.mrb[0].mxu0 %v132
    %v245 = vpop.f32.mrb[0].mxu0
    %v246 = vadd.f32 0.0, %v245
    %v247 = vpop.f32.mrb[0].mxu0
    %v248 = vpop.f32.mrb[0].mxu0
    %v249 = vadd.f32 0.0, %v248
    %v250 = vpop.f32.mrb[0].mxu0
    %251 = vmatprep.mubr.bf16.mxu0 0
    %252 = vmatmul.mubr.bf16.gmra.mrb[0].mxu0 %v133
    %v253 = vpop.f32.mrb[0].mxu0
    %v254 = vadd.f32 0.0, %v253
    %v255 = vpop.f32.mrb[0].mxu0
    %v256 = vpop.f32.mrb[0].mxu0
    %v257 = vadd.f32 0.0, %v256
    %v258 = vpop.f32.mrb[0].mxu0
    %259 = vmatprep.mubr.bf16.mxu0 0
    %260 = vmatmul.mubr.bf16.gmra.mrb[0].mxu0 %v134
    %v261 = vpop.f32.mrb[0].mxu0
    %v262 = vadd.f32 0.0, %v261
    %v263 = vpop.f32.mrb[0].mxu0
    %v264 = vpop.f32.mrb[0].mxu0
    %v265 = vadd.f32 0.0, %v264
    %v266 = vpop.f32.mrb[0].mxu0
    %267 = vmatprep.mubr.bf16.mxu0 0
    %268 = vmatmul.mubr.bf16.gmra.mrb[0].mxu0 %v135
    %v269 = vpop.f32.mrb[0].mxu0
    %v270 = vadd.f32 0.0, %v269
    %v271 = vpop.f32.mrb[0].mxu0
    %v272 = vpop.f32.mrb[0].mxu0
    %v273 = vadd.f32 0.0, %v272
    %v274 = vpop.f32.mrb[0].mxu0
    %275 = vmatprep.mubr.bf16.mxu0 0
    %276 = vmatmul.mubr.bf16.gmra.mrb[0].mxu0 %v136
    %v277 = vpop.f32.mrb[0].mxu0
    %v278 = vadd.f32 0.0, %v277
    %v279 = vpop.f32.mrb[0].mxu0
    %v280 = vpop.f32.mrb[0].mxu0
    %v281 = vadd.f32 0.0, %v280
    %v282 = vpop.f32.mrb[0].mxu0
    %283 = vmatprep.mubr.bf16.mxu0 0
    %284 = vmatmul.mubr.bf16.gmra.mrb[0].mxu0 %v137
    %v285 = vpop.f32.mrb[0].mxu0
    %v286 = vadd.f32 0.0, %v285
    %v287 = vpop.f32.mrb[0].mxu0
    %v288 = vpop.f32.mrb[0].mxu0
    %v289 = vadd.f32 0.0, %v288
    %v290 = vpop.f32.mrb[0].mxu0
    %291 = vmatprep.mubr.bf16.mxu0 0
    %292 = vmatmul.mubr.bf16.gmra.mrb[0].mxu0 %v138
    %v293 = vpop.f32.mrb[0].mxu0
    %v294 = vadd.f32 0.0, %v293
    %v295 = vpop.f32.mrb[0].mxu0
    %v296 = vpop.f32.mrb[0].mxu0
    %v297 = vadd.f32 0.0, %v296
    %v298 = vpop.f32.mrb[0].mxu0
    %299 = vdwg.mxu0
    %v300 = vld [vmem:[%s3] sm:$0xff]
    %301 = vset.pattern.permute.xlu0 0
    %302 = vperm.xlu0 %301, %v300
    %v303 = vpop.permute.xlu0 %302
    %vm304 = vcmp.eq.s32.totalorder %v34, %v303
    %v305 = vsel %vm304, 1.0, 0.0
    %v306 = vld [vmem:[%s2] sm:$0x1]
    %v308 = vlaneseq
    %v309 = vshrl.u32 %v308, 7
    %v310 = vsub.s32 0, %v309
    %v311 = vrot.slane %v306, %v310
    %v313 = vmul.f32 %v305, %v311
    %314 = vadd.xlane.f32.xlu0 %v313
    %v315 = vpop.xlane.xlu0 %314
    %v316 = vmul.f32 %v315, 1.442695
    %v317 = vpow.pop %v316
    %vm318 = vcmask 7168
    %319 = vst.msk [vmem:[%s9] sm:$0xff] %vm318, %v317
    %v320 = vpack.c.bf16 %v241, %v238
    %v321 = vpack.c.bf16 %v249, %v246
    %v322 = vpack.c.bf16 %v257, %v254
    %v323 = vpack.c.bf16 %v265, %v262
    %v324 = vpack.c.bf16 %v273, %v270
    %v325 = vpack.c.bf16 %v281, %v278
    %v326 = vpack.c.bf16 %v289, %v286
    %v327 = vpack.c.bf16 %v297, %v294
    %v328 = vrot.slane %v238, 1
    %v329 = vrot.slane %v241, 1
    %v330 = vrot.slane %v246, 1
    %v331 = vrot.slane %v249, 1
    %v332 = vrot.slane %v254, 1
    %v333 = vrot.slane %v257, 1
    %v334 = vrot.slane %v262, 1
    %v335 = vrot.slane %v265, 1
    %v336 = vrot.slane %v270, 1
    %v337 = vrot.slane %v273, 1
    %v338 = vrot.slane %v278, 1
    %v339 = vrot.slane %v281, 1
    %v340 = vrot.slane %v286, 1
    %v341 = vrot.slane %v289, 1
    %v342 = vrot.slane %v294, 1
    %v343 = vrot.slane %v297, 1
    %v344 = vlaneseq
    %v345 = vshrl.u32 %v344, 7
    %vm346 = vcmp.lt.s32.totalorder %v345, 7
    %v347 = vsel %vm346, %v342, %v343
    %v348 = vsel %vm346, %v341, %v342
    %v349 = vsel %vm346, %v340, %v341
    %v350 = vsel %vm346, %v339, %v340
    %v351 = vsel %vm346, %v338, %v339
    %v352 = vsel %vm346, %v337, %v338
    %v353 = vsel %vm346, %v336, %v337
    %v354 = vsel %vm346, %v335, %v336
    %v355 = vsel %vm346, %v334, %v335
    %v356 = vsel %vm346, %v333, %v334
    %v357 = vsel %vm346, %v332, %v333
    %v358 = vsel %vm346, %v331, %v332
    %v359 = vsel %vm346, %v330, %v331
    %v360 = vsel %vm346, %v329, %v330
    %v361 = vsel %vm346, %v328, %v329
    %v362 = vsel %vm346, %v343, %v328
    %v363 = vpack.c.bf16 %v360, %v361
    %v364 = vpack.c.bf16 %v358, %v359
    %v365 = vpack.c.bf16 %v356, %v357
    %v366 = vpack.c.bf16 %v354, %v355
    %v367 = vpack.c.bf16 %v352, %v353
    %v368 = vpack.c.bf16 %v350, %v351
    %v369 = vpack.c.bf16 %v348, %v349
    %v370 = vpack.c.bf16 %v362, %v347
    %v371 = vrot.slane %v238, 2
    %v372 = vrot.slane %v241, 2
    %v373 = vrot.slane %v246, 2
    %v374 = vrot.slane %v249, 2
    %v375 = vrot.slane %v254, 2
    %v376 = vrot.slane %v257, 2
    %v377 = vrot.slane %v262, 2
    %v378 = vrot.slane %v265, 2
    %v379 = vrot.slane %v270, 2
    %v380 = vrot.slane %v273, 2
    %v381 = vrot.slane %v278, 2
    %v382 = vrot.slane %v281, 2
    %v383 = vrot.slane %v286, 2
    %v384 = vrot.slane %v289, 2
    %v385 = vrot.slane %v294, 2
    %v386 = vrot.slane %v297, 2
    %vm387 = vcmp.lt.s32.totalorder %v345, 6
    %v388 = vsel %vm387, %v385, %v386
    %v389 = vsel %vm387, %v384, %v385
    %v390 = vsel %vm387, %v383, %v384
    %v391 = vsel %vm387, %v382, %v383
    %v392 = vsel %vm387, %v381, %v382
    %v393 = vsel %vm387, %v380, %v381
    %v394 = vsel %vm387, %v379, %v380
    %v395 = vsel %vm387, %v378, %v379
    %v396 = vsel %vm387, %v377, %v378
    %v397 = vsel %vm387, %v376, %v377
    %v398 = vsel %vm387, %v375, %v376
    %v399 = vsel %vm387, %v374, %v375
    %v400 = vsel %vm387, %v373, %v374
    %v401 = vsel %vm387, %v372, %v373
    %v402 = vsel %vm387, %v371, %v372
    %v403 = vsel %vm387, %v386, %v371
    %v404 = vpack.c.bf16 %v401, %v402
    %v405 = vpack.c.bf16 %v399, %v400
    %v406 = vpack.c.bf16 %v397, %v398
    %v407 = vpack.c.bf16 %v395, %v396
    %v408 = vpack.c.bf16 %v393, %v394
    %v409 = vpack.c.bf16 %v391, %v392
    %v410 = vpack.c.bf16 %v389, %v390
    %v411 = vpack.c.bf16 %v403, %v388
    %v412 = vrot.slane %v238, 3
    %v413 = vrot.slane %v241, 3
    %v414 = vrot.slane %v246, 3
    %v415 = vrot.slane %v249, 3
    %v416 = vrot.slane %v254, 3
    %v417 = vrot.slane %v257, 3
    %v418 = vrot.slane %v262, 3
    %v419 = vrot.slane %v265, 3
    %v420 = vrot.slane %v270, 3
    %v421 = vrot.slane %v273, 3
    %v422 = vrot.slane %v278, 3
    %v423 = vrot.slane %v281, 3
    %v424 = vrot.slane %v286, 3
    %v425 = vrot.slane %v289, 3
    %v426 = vrot.slane %v294, 3
    %v427 = vrot.slane %v297, 3
    %vm428 = vcmp.lt.s32.totalorder %v345, 5
    %v429 = vsel %vm428, %v426, %v427
    %v430 = vsel %vm428, %v425, %v426
    %v431 = vsel %vm428, %v424, %v425
    %v432 = vsel %vm428, %v423, %v424
    %v433 = vsel %vm428, %v422, %v423
    %v434 = vsel %vm428, %v421, %v422
    %v435 = vsel %vm428, %v420, %v421
    %v436 = vsel %vm428, %v419, %v420
    %v437 = vsel %vm428, %v418, %v419
    %v438 = vsel %vm428, %v417, %v418
    %v439 = vsel %vm428, %v416, %v417
    %v440 = vsel %vm428, %v415, %v416
    %v441 = vsel %vm428, %v414, %v415
    %v442 = vsel %vm428, %v413, %v414
    %v443 = vsel %vm428, %v412, %v413
    %v444 = vsel %vm428, %v427, %v412
    %v445 = vpack.c.bf16 %v442, %v443
    %v446 = vpack.c.bf16 %v440, %v441
    %v447 = vpack.c.bf16 %v438, %v439
    %v448 = vpack.c.bf16 %v436, %v437
    %v449 = vpack.c.bf16 %v434, %v435
    %v450 = vpack.c.bf16 %v432, %v433
    %v451 = vpack.c.bf16 %v430, %v431
    %v452 = vpack.c.bf16 %v444, %v429
    %461 = vrot.lane.b32.xlu0 %v363, 32
    %v462 = vpop.permute.xlu0 %461
    %463 = vrot.lane.b32.xlu0 %v364, 32
    %v464 = vpop.permute.xlu0 %463
    %465 = vrot.lane.b32.xlu0 %v365, 32
    %v466 = vpop.permute.xlu0 %465
    %467 = vrot.lane.b32.xlu0 %v366, 32
    %v468 = vpop.permute.xlu0 %467
    %469 = vrot.lane.b32.xlu0 %v367, 32
    %v470 = vpop.permute.xlu0 %469
    %471 = vrot.lane.b32.xlu0 %v368, 32
    %v472 = vpop.permute.xlu0 %471
    %473 = vrot.lane.b32.xlu0 %v369, 32
    %v474 = vpop.permute.xlu0 %473
    %475 = vrot.lane.b32.xlu0 %v370, 32
    %v476 = vpop.permute.xlu0 %475
    %485 = vrot.lane.b32.xlu0 %v404, 64
    %v486 = vpop.permute.xlu0 %485
    %487 = vrot.lane.b32.xlu0 %v405, 64
    %v488 = vpop.permute.xlu0 %487
    %489 = vrot.lane.b32.xlu0 %v406, 64
    %v490 = vpop.permute.xlu0 %489
    %491 = vrot.lane.b32.xlu0 %v407, 64
    %v492 = vpop.permute.xlu0 %491
    %493 = vrot.lane.b32.xlu0 %v408, 64
    %v494 = vpop.permute.xlu0 %493
    %495 = vrot.lane.b32.xlu0 %v409, 64
    %v496 = vpop.permute.xlu0 %495
    %497 = vrot.lane.b32.xlu0 %v410, 64
    %v498 = vpop.permute.xlu0 %497
    %499 = vrot.lane.b32.xlu0 %v411, 64
    %v500 = vpop.permute.xlu0 %499
    %509 = vrot.lane.b32.xlu0 %v445, 96
    %v510 = vpop.permute.xlu0 %509
    %511 = vrot.lane.b32.xlu0 %v446, 96
    %v512 = vpop.permute.xlu0 %511
    %513 = vrot.lane.b32.xlu0 %v447, 96
    %v514 = vpop.permute.xlu0 %513
    %515 = vrot.lane.b32.xlu0 %v448, 96
    %v516 = vpop.permute.xlu0 %515
    %517 = vrot.lane.b32.xlu0 %v449, 96
    %v518 = vpop.permute.xlu0 %517
    %519 = vrot.lane.b32.xlu0 %v450, 96
    %v520 = vpop.permute.xlu0 %519
    %521 = vrot.lane.b32.xlu0 %v451, 96
    %v522 = vpop.permute.xlu0 %521
    %523 = vrot.lane.b32.xlu0 %v452, 96
    %v524 = vpop.permute.xlu0 %523
    %vm525 = vcmask 261120
    %v528 = vsel %vm525, %v320, %v462
    %v531 = vsel %vm525, %v321, %v464
    %v534 = vsel %vm525, %v322, %v466
    %v537 = vsel %vm525, %v323, %v468
    %v540 = vsel %vm525, %v324, %v470
    %v543 = vsel %vm525, %v325, %v472
    %v546 = vsel %vm525, %v326, %v474
    %v549 = vsel %vm525, %v327, %v476
    %vm550 = vcmask 523264
    %v552 = vsel %vm550, %v528, %v486
    %v554 = vsel %vm550, %v531, %v488
    %v556 = vsel %vm550, %v534, %v490
    %v558 = vsel %vm550, %v537, %v492
    %v560 = vsel %vm550, %v540, %v494
    %v562 = vsel %vm550, %v543, %v496
    %v564 = vsel %vm550, %v546, %v498
    %v566 = vsel %vm550, %v549, %v500
    %vm567 = vcmask 785408
    %v569 = vsel %vm567, %v552, %v510
    %v572 = vsel %vm567, %v554, %v512
    %v575 = vsel %vm567, %v556, %v514
    %v578 = vsel %vm567, %v558, %v516
    %v581 = vsel %vm567, %v560, %v518
    %v584 = vsel %vm567, %v562, %v520
    %v587 = vsel %vm567, %v564, %v522
    %v590 = vsel %vm567, %v566, %v524
    %v592 = vld [vmem:[%s4] sm:$0xf]
    %v593 = vld [vmem:[%s4 + $0x4] sm:$0xf]
    %v594 = vld [vmem:[%s4 + $0x8] sm:$0xf]
    %v595 = vld [vmem:[%s4 + $0xc] sm:$0xf]
    %v596 = vld [vmem:[%s4 + $0x10] sm:$0xf]
    %v597 = vld [vmem:[%s4 + $0x14] sm:$0xf]
    %v598 = vld [vmem:[%s4 + $0x18] sm:$0xf]
    %v599 = vld [vmem:[%s4 + $0x1c] sm:$0xf]
    %v600 = vld [vmem:[%s4 + $0x20] sm:$0xf]
    %v601 = vld [vmem:[%s4 + $0x24] sm:$0xf]
    %v602 = vld [vmem:[%s4 + $0x28] sm:$0xf]
    %v603 = vld [vmem:[%s4 + $0x2c] sm:$0xf]
    %v604 = vld [vmem:[%s4 + $0x30] sm:$0xf]
    %v605 = vld [vmem:[%s4 + $0x34] sm:$0xf]
    %v606 = vld [vmem:[%s4 + $0x38] sm:$0xf]
    %v607 = vld [vmem:[%s4 + $0x3c] sm:$0xf]
    %v624 = vunpack.c.l.b16 %v592
    %v625 = vunpack.c.l.b16 %v593
    %v626 = vunpack.c.l.b16 %v594
    %v627 = vunpack.c.l.b16 %v595
    %v628 = vunpack.c.l.b16 %v596
    %v629 = vunpack.c.l.b16 %v597
    %v630 = vunpack.c.l.b16 %v598
    %v631 = vunpack.c.l.b16 %v599
    %v632 = vunpack.c.l.b16 %v600
    %v633 = vunpack.c.l.b16 %v601
    %v634 = vunpack.c.l.b16 %v602
    %v635 = vunpack.c.l.b16 %v603
    %v636 = vunpack.c.l.b16 %v604
    %v637 = vunpack.c.l.b16 %v605
    %v638 = vunpack.c.l.b16 %v606
    %v639 = vunpack.c.l.b16 %v607
    %v640 = vpack.c.b16 %v625, %v624
    %v641 = vpack.c.b16 %v627, %v626
    %v642 = vpack.c.b16 %v629, %v628
    %v643 = vpack.c.b16 %v631, %v630
    %v644 = vpack.c.b16 %v633, %v632
    %v645 = vpack.c.b16 %v635, %v634
    %v646 = vpack.c.b16 %v637, %v636
    %v647 = vpack.c.b16 %v639, %v638
    %656 = vmatprep.subr.bf16.mxu0 0
    %657 = vmatpush1.bf16.msra.mxu0 %v640
    %658 = vmatprep.subr.bf16.mxu0 0
    %659 = vmatpush1.bf16.msra.mxu0 %v641
    %660 = vmatprep.subr.bf16.mxu0 0
    %661 = vmatpush1.bf16.msra.mxu0 %v642
    %662 = vmatprep.subr.bf16.mxu0 0
    %663 = vmatpush1.bf16.msra.mxu0 %v643
    %664 = vmatprep.subr.bf16.mxu0 0
    %665 = vmatpush1.bf16.msra.mxu0 %v644
    %666 = vmatprep.subr.bf16.mxu0 0
    %667 = vmatpush1.bf16.msra.mxu0 %v645
    %668 = vmatprep.subr.bf16.mxu0 0
    %669 = vmatpush1.bf16.msra.mxu0 %v646
    %670 = vmatprep.subr.bf16.mxu0 0
    %671 = vmatpush1.bf16.msra.mxu0 %v647
    %672 = vmatprep.subr.bf16.mxu0 0
    %673 = vmatpush1.bf16.msra.mxu0 0
    %674 = vmatprep.subr.bf16.mxu0 0
    %675 = vmatpush1.bf16.msra.mxu0 0
    %676 = vmatprep.subr.bf16.mxu0 0
    %677 = vmatpush1.bf16.msra.mxu0 0
    %678 = vmatprep.subr.bf16.mxu0 0
    %679 = vmatpush1.bf16.msra.mxu0 0
    %680 = vmatprep.subr.bf16.mxu0 0
    %681 = vmatpush1.bf16.msra.mxu0 0
    %682 = vmatprep.subr.bf16.mxu0 0
    %683 = vmatpush1.bf16.msra.mxu0 0
    %684 = vmatprep.subr.bf16.mxu0 0
    %685 = vmatpush1.bf16.msra.mxu0 0
    %686 = vmatprep.subr.bf16.mxu0 0
    %687 = vmatpush1.bf16.msra.mxu0 0
    %688 = vmatprep.mubr.bf16.mxu0 0
    %689 = vmatmul.mubr.bf16.gmra.mrb[0].mxu0 %v569
    %v690 = vpop.f32.mrb[0].mxu0
    %v691 = vadd.f32 0.0, %v690
    %v692 = vpop.f32.mrb[0].mxu0
    %v693 = vpop.f32.mrb[0].mxu0
    %v694 = vadd.f32 0.0, %v693
    %v695 = vpop.f32.mrb[0].mxu0
    %696 = vmatprep.mubr.bf16.mxu0 0
    %697 = vmatmul.mubr.bf16.gmra.mrb[0].mxu0 %v572
    %v698 = vpop.f32.mrb[0].mxu0
    %v699 = vadd.f32 0.0, %v698
    %v700 = vpop.f32.mrb[0].mxu0
    %v701 = vpop.f32.mrb[0].mxu0
    %v702 = vadd.f32 0.0, %v701
    %v703 = vpop.f32.mrb[0].mxu0
    %704 = vmatprep.mubr.bf16.mxu0 0
    %705 = vmatmul.mubr.bf16.gmra.mrb[0].mxu0 %v575
    %v706 = vpop.f32.mrb[0].mxu0
    %v707 = vadd.f32 0.0, %v706
    %v708 = vpop.f32.mrb[0].mxu0
    %v709 = vpop.f32.mrb[0].mxu0
    %v710 = vadd.f32 0.0, %v709
    %v711 = vpop.f32.mrb[0].mxu0
    %712 = vmatprep.mubr.bf16.mxu0 0
    %713 = vmatmul.mubr.bf16.gmra.mrb[0].mxu0 %v578
    %v714 = vpop.f32.mrb[0].mxu0
    %v715 = vadd.f32 0.0, %v714
    %v716 = vpop.f32.mrb[0].mxu0
    %v717 = vpop.f32.mrb[0].mxu0
    %v718 = vadd.f32 0.0, %v717
    %v719 = vpop.f32.mrb[0].mxu0
    %720 = vmatprep.mubr.bf16.mxu0 0
    %721 = vmatmul.mubr.bf16.gmra.mrb[0].mxu0 %v581
    %v722 = vpop.f32.mrb[0].mxu0
    %v723 = vadd.f32 0.0, %v722
    %v724 = vpop.f32.mrb[0].mxu0
    %v725 = vpop.f32.mrb[0].mxu0
    %v726 = vadd.f32 0.0, %v725
    %v727 = vpop.f32.mrb[0].mxu0
    %728 = vmatprep.mubr.bf16.mxu0 0
    %729 = vmatmul.mubr.bf16.gmra.mrb[0].mxu0 %v584
    %v730 = vpop.f32.mrb[0].mxu0
    %v731 = vadd.f32 0.0, %v730
    %v732 = vpop.f32.mrb[0].mxu0
    %v733 = vpop.f32.mrb[0].mxu0
    %v734 = vadd.f32 0.0, %v733
    %v735 = vpop.f32.mrb[0].mxu0
    %736 = vmatprep.mubr.bf16.mxu0 0
    %737 = vmatmul.mubr.bf16.gmra.mrb[0].mxu0 %v587
    %v738 = vpop.f32.mrb[0].mxu0
    %v739 = vadd.f32 0.0, %v738
    %v740 = vpop.f32.mrb[0].mxu0
    %v741 = vpop.f32.mrb[0].mxu0
    %v742 = vadd.f32 0.0, %v741
    %v743 = vpop.f32.mrb[0].mxu0
    %744 = vmatprep.mubr.bf16.mxu0 0
    %745 = vmatmul.mubr.bf16.gmra.mrb[0].mxu0 %v590
    %v746 = vpop.f32.mrb[0].mxu0
    %v747 = vadd.f32 0.0, %v746
    %v748 = vpop.f32.mrb[0].mxu0
    %v749 = vpop.f32.mrb[0].mxu0
    %v750 = vadd.f32 0.0, %v749
    %v751 = vpop.f32.mrb[0].mxu0
    %752 = vdwg.mxu0
    %v753 = vld [vmem:[%s5] sm:$0xff]
    %v754 = vld [vmem:[%s5 + $0x8] sm:$0xff]
    %v755 = vadd.f32 %v691, %v753
    %v756 = vadd.f32 %v694, %v754
    %v757 = vadd.f32 %v699, %v753
    %v758 = vadd.f32 %v702, %v754
    %v759 = vadd.f32 %v707, %v753
    %v760 = vadd.f32 %v710, %v754
    %v761 = vadd.f32 %v715, %v753
    %v762 = vadd.f32 %v718, %v754
    %v763 = vadd.f32 %v723, %v753
    %v764 = vadd.f32 %v726, %v754
    %v765 = vadd.f32 %v731, %v753
    %v766 = vadd.f32 %v734, %v754
    %v767 = vadd.f32 %v739, %v753
    %v768 = vadd.f32 %v742, %v754
    %v769 = vadd.f32 %v747, %v753
    %v770 = vadd.f32 %v750, %v754
    %vm771 = vcmask 392192
    %v772 = vsel %vm771, %v755, -inf
    %v773 = vsel %vm771, %v756, -inf
    %v774 = vmax.f32 %v772, %v773
    %v775 = vrot.slane %v774, 4
    %v776 = vmax.f32 %v774, %v775
    %v777 = vrot.slane %v776, 2
    %v778 = vmax.f32 %v776, %v777
    %v779 = vrot.slane %v778, 1
    %v780 = vmax.f32 %v778, %v779
    %v781 = vsel %vm771, %v757, -inf
    %v782 = vsel %vm771, %v758, -inf
    %v783 = vmax.f32 %v781, %v782
    %v784 = vrot.slane %v783, 4
    %v785 = vmax.f32 %v783, %v784
    %v786 = vrot.slane %v785, 2
    %v787 = vmax.f32 %v785, %v786
    %v788 = vrot.slane %v787, 1
    %v789 = vmax.f32 %v787, %v788
    %v790 = vsel %vm771, %v759, -inf
    %v791 = vsel %vm771, %v760, -inf
    %v792 = vmax.f32 %v790, %v791
    %v793 = vrot.slane %v792, 4
    %v794 = vmax.f32 %v792, %v793
    %v795 = vrot.slane %v794, 2
    %v796 = vmax.f32 %v794, %v795
    %v797 = vrot.slane %v796, 1
    %v798 = vmax.f32 %v796, %v797
    %v799 = vsel %vm771, %v761, -inf
    %v800 = vsel %vm771, %v762, -inf
    %v801 = vmax.f32 %v799, %v800
    %v802 = vrot.slane %v801, 4
    %v803 = vmax.f32 %v801, %v802
    %v804 = vrot.slane %v803, 2
    %v805 = vmax.f32 %v803, %v804
    %v806 = vrot.slane %v805, 1
    %v807 = vmax.f32 %v805, %v806
    %v808 = vsel %vm771, %v763, -inf
    %v809 = vsel %vm771, %v764, -inf
    %v810 = vmax.f32 %v808, %v809
    %v811 = vrot.slane %v810, 4
    %v812 = vmax.f32 %v810, %v811
    %v813 = vrot.slane %v812, 2
    %v814 = vmax.f32 %v812, %v813
    %v815 = vrot.slane %v814, 1
    %v816 = vmax.f32 %v814, %v815
    %v817 = vsel %vm771, %v765, -inf
    %v818 = vsel %vm771, %v766, -inf
    %v819 = vmax.f32 %v817, %v818
    %v820 = vrot.slane %v819, 4
    %v821 = vmax.f32 %v819, %v820
    %v822 = vrot.slane %v821, 2
    %v823 = vmax.f32 %v821, %v822
    %v824 = vrot.slane %v823, 1
    %v825 = vmax.f32 %v823, %v824
    %v826 = vsel %vm771, %v767, -inf
    %v827 = vsel %vm771, %v768, -inf
    %v828 = vmax.f32 %v826, %v827
    %v829 = vrot.slane %v828, 4
    %v830 = vmax.f32 %v828, %v829
    %v831 = vrot.slane %v830, 2
    %v832 = vmax.f32 %v830, %v831
    %v833 = vrot.slane %v832, 1
    %v834 = vmax.f32 %v832, %v833
    %v835 = vsel %vm771, %v769, -inf
    %v836 = vsel %vm771, %v770, -inf
    %v837 = vmax.f32 %v835, %v836
    %v838 = vrot.slane %v837, 4
    %v839 = vmax.f32 %v837, %v838
    %v840 = vrot.slane %v839, 2
    %v841 = vmax.f32 %v839, %v840
    %v842 = vrot.slane %v841, 1
    %v843 = vmax.f32 %v841, %v842
    %v844 = vmax.f32 %v780, 0.0
    %v845 = vmax.f32 %v789, 0.0
    %v846 = vmax.f32 %v798, 0.0
    %v847 = vmax.f32 %v807, 0.0
    %v848 = vmax.f32 %v816, 0.0
    %v849 = vmax.f32 %v825, 0.0
    %v850 = vmax.f32 %v834, 0.0
    %v851 = vmax.f32 %v843, 0.0
    %vm860 = vcmask 1041409
    %v861 = vsel %vm860, %v845, %v844
    %vm862 = vcmask 1042434
    %v863 = vsel %vm862, %v846, %v861
    %vm864 = vcmask 1043459
    %v865 = vsel %vm864, %v847, %v863
    %vm866 = vcmask 1044484
    %v867 = vsel %vm866, %v848, %v865
    %vm868 = vcmask 1045509
    %v869 = vsel %vm868, %v849, %v867
    %vm870 = vcmask 1046534
    %v871 = vsel %vm870, %v850, %v869
    %vm872 = vcmask 1047559
    %v873 = vsel %vm872, %v851, %v871
    %v875 = vmul.f32 %v317, %v873
    %v876 = vsel %vm771, %v875, 0.0
    %v877 = vrot.slane %v876, 4
    %v878 = vadd.f32 %v876, %v877
    %v879 = vrot.slane %v878, 2
    %v880 = vadd.f32 %v878, %v879
    %v881 = vrot.slane %v880, 1
    %v882 = vadd.f32 %v880, %v881
    %v883 = vtanh.pop %v882
    %v884 = vpack.c.bf16 %v883, %v883
    %v885 = vld [vmem:[%s6] sm:$0xf]
    %v886 = vld [vmem:[%s6 + $0x4] sm:$0xf]
    %v887 = vld [vmem:[%s6 + $0x8] sm:$0xf]
    %v888 = vld [vmem:[%s6 + $0xc] sm:$0xf]
    %v889 = vld [vmem:[%s6 + $0x10] sm:$0xf]
    %v890 = vld [vmem:[%s6 + $0x14] sm:$0xf]
    %v891 = vld [vmem:[%s7] sm:$0x1]
    %v898 = vunpack.c.l.b16 %v885
    %v899 = vunpack.c.l.b16 %v886
    %v900 = vunpack.c.l.b16 %v887
    %v901 = vunpack.c.l.b16 %v888
    %v902 = vunpack.c.l.b16 %v889
    %v903 = vunpack.c.l.b16 %v890
    %v904 = vpack.c.b16 %v899, %v898
    %v905 = vpack.c.b16 %v901, %v900
    %v906 = vpack.c.b16 %v903, %v902
    %v911 = vsel %vm771, %v884, 0
    %913 = vmatprep.subr.bf16.mxu0 0
    %914 = vmatpush1.bf16.msra.mxu0 %v904
    %915 = vmatprep.subr.bf16.mxu0 0
    %916 = vmatpush1.bf16.msra.mxu0 %v905
    %917 = vmatprep.subr.bf16.mxu0 0
    %918 = vmatpush1.bf16.msra.mxu0 %v906
    %919 = vmatprep.subr.bf16.mxu0 0
    %920 = vmatpush1.bf16.msra.mxu0 0
    %921 = vmatprep.subr.bf16.mxu0 0
    %922 = vmatpush1.bf16.msra.mxu0 0
    %923 = vmatprep.subr.bf16.mxu0 0
    %924 = vmatpush1.bf16.msra.mxu0 0
    %925 = vmatprep.subr.bf16.mxu0 0
    %926 = vmatpush1.bf16.msra.mxu0 0
    %927 = vmatprep.subr.bf16.mxu0 0
    %928 = vmatpush1.bf16.msra.mxu0 0
    %929 = vmatprep.subr.bf16.mxu0 0
    %930 = vmatpush1.bf16.msra.mxu0 0
    %931 = vmatprep.subr.bf16.mxu0 0
    %932 = vmatpush1.bf16.msra.mxu0 0
    %933 = vmatprep.subr.bf16.mxu0 0
    %934 = vmatpush1.bf16.msra.mxu0 0
    %935 = vmatprep.subr.bf16.mxu0 0
    %936 = vmatpush1.bf16.msra.mxu0 0
    %937 = vmatprep.subr.bf16.mxu0 0
    %938 = vmatpush1.bf16.msra.mxu0 0
    %939 = vmatprep.subr.bf16.mxu0 0
    %940 = vmatpush1.bf16.msra.mxu0 0
    %941 = vmatprep.subr.bf16.mxu0 0
    %942 = vmatpush1.bf16.msra.mxu0 0
    %943 = vmatprep.subr.bf16.mxu0 0
    %944 = vmatpush1.bf16.msra.mxu0 0
    %945 = vmatprep.mubr.bf16.mxu0 0
    %946 = vmatmul.mubr.bf16.gmra.mrb[0].mxu0 %v911
    %v947 = vpop.f32.mrb[0].mxu0
    %v948 = vadd.f32 %v891, %v947
    %v949 = vpop.f32.mrb[0].mxu0
    %v950 = vpop.f32.mrb[0].mxu0
    %v951 = vpop.f32.mrb[0].mxu0
    %952 = vdwg.mxu0
    %953 = vst [vmem:[#allocation2] sm:$0x1] %v948
    // Predicated region
    $region34: #{neat_cnn_wpe_forward.1} parent=1 // pred_check
      _
    $region35: #{neat_cnn_wpe_forward.1} parent=1 // pred_check_branch
      %955 = sbr.rel (0) target = $region37
    $region36: #{neat_cnn_wpe_forward.1} parent=1 // pred_region
      %s957 = ssub.s32 16, 16
      %958 = vsyncadd [#allocation3], %s957
      %s960 = sshll.u32 [#allocation2], 4
      %s961 = int_to_ptr.vmem [resolvable:$true] %s960
      %963 = dma.vmem_to_hbm [thread:$0]  %s961, 16, %s8, [#allocation3]
    $region37: #{neat_cnn_wpe_forward.1} parent=1 // pred_fallthru
      _
    // Predicated region
    $region38: #{neat_cnn_wpe_forward.1} parent=1 // pred_check
      _
    $region39: #{neat_cnn_wpe_forward.1} parent=1 // pred_check_branch
      %965 = sbr.rel (0) target = $region41
    $region40: #{neat_cnn_wpe_forward.1} parent=1 // pred_region
      _
    $region41: #{neat_cnn_wpe_forward.1} parent=1 // pred_fallthru
      _
    // Predicated region
    $region42: #{neat_cnn_wpe_forward.1} parent=1 // pred_check
      _
    $region43: #{neat_cnn_wpe_forward.1} parent=1 // pred_check_branch
      %967 = sbr.rel (0) target = $region45
    $region44: #{neat_cnn_wpe_forward.1} parent=1 // pred_region
      %968 = dma.done [#allocation3], 16
    $region45: #{neat_cnn_wpe_forward.1} parent=1 // pred_fallthru
      _
    // Predicated region
    $region46: #{neat_cnn_wpe_forward.1} parent=1 // pred_check
      _
    $region47: #{neat_cnn_wpe_forward.1} parent=1 // pred_check_branch
      %970 = sbr.rel (0) target = $region49
    $region48: #{neat_cnn_wpe_forward.1} parent=1 // pred_region
      _
    $region49: #{neat_cnn_wpe_forward.1} parent=1 // pred_fallthru
      _
    %971 = vsyncpa [#allocation3], 1

</llo_original>
